<compile_context>
chip_gen: v6e
topology: v6e:2x2x1
jax: 0.10.0
libtpu: 0.0.40
codegen_flags: <defaults>
</compile_context>

<pallas_src>
import functools

import jax
import jax.numpy as jnp
from jax.experimental import pallas as pl
from jax.experimental.pallas import tpu as pltpu


def _round_up(x, m):
    return ((x + m - 1) // m) * m


def _default_vmem_limit():
    """min(96 MiB, 3/4 of physical VMEM): ~96 MiB on v5e/v6e (128 MiB), ~48 MiB on v7x (64 MiB)."""
    cap = 64 * 1024 * 1024
    try:
        info = pltpu.get_tpu_info()
        cap = int(getattr(info, "vmem_capacity_bytes", cap) or cap)
    except Exception:
        pass
    return int(min(96 * 1024 * 1024, (cap * 3) // 4))


def _vmem_bytes(tm, tk, s_rows, fi_p, fo_p, hsrc_resident, out_itemsize):
    """Rough double-buffered VMEM footprint of one layer's pallas_call."""
    n = 2 * tm * tk                                          # A tile (uint8)
    n += 2 * (s_rows if hsrc_resident else tk) * fi_p * 2    # h_src (bf16)
    n += 2 * tm * fi_p * 2                                   # h_dst tile (bf16)
    n += 2 * (fi_p * fo_p * 2 + fo_p * 4)                    # W (bf16) + bias (f32)
    n += 2 * tm * fo_p * out_itemsize                        # output tile
    n += tm * fi_p * 4 + tm * 4                              # acc + deg scratch
    return n


def _sage_gcn_kernel(a_ref, hsrc_ref, hdst_ref, w_ref, b_ref, o_ref, acc_ref, deg_ref,
                     *, tk, hsrc_resident, apply_relu):
    """One SAGEConv('gcn') layer, tiled over (dst rows, src reduction).

    a_ref    : [tm, tk]        uint8 dense adjacency tile ({0,1})
    hsrc_ref : [S_rows, Fi_p]  (resident) or [tk, Fi_p] (slab)   bf16 source features
    hdst_ref : [tm, Fi_p]      bf16 dst features (dst-row tile of the same HBM array)
    w_ref    : [Fi_p, Fo_p]    bf16 fc_neigh weight (zero-padded)
    b_ref    : [1, Fo_p]       f32 bias (zero-padded)
    o_ref    : [tm, Fo_p]      output tile (bf16 for layer 1, f32 for layer 2)
    acc_ref  : [tm, Fi_p]      f32 accumulator (h_dst + neighbor-feature sum)
    deg_ref  : [tm, 1]         f32 accumulated in-degree
    """
    k = pl.program_id(1)

    @pl.when(k == 0)
    def _init():
        # Fold the '+ h_dst' self term into the accumulator init (hidden under the first
        # reduction matmul instead of sitting in the serial finalize epilogue).
        acc_ref[...] = hdst_ref[...].astype(jnp.float32)
        deg_ref[...] = jnp.zeros_like(deg_ref)

    a_f32 = a_ref[...].astype(jnp.float32)                   # uint8 -> f32 (VPU)
    if hsrc_resident:
        off = pl.multiple_of(k * tk, 128)
        h_slab = hsrc_ref[pl.ds(off, tk), :]                  # slice the resident buffer
    else:
        h_slab = hsrc_ref[...]

    # Neighbor-sum aggregation on the MXU (bf16 operands, f32 accumulation).
    acc_ref[...] += jnp.dot(a_f32.astype(jnp.bfloat16), h_slab,
                            preferred_element_type=jnp.float32)
    # In-degree via an XLU row-sum (free slot while MXU/DMA are the bottleneck).
    deg_ref[...] += jnp.sum(a_f32, axis=-1, keepdims=True)

    @pl.when(k == pl.num_programs(1) - 1)
    def _finalize():
        inv = 1.0 / (deg_ref[...] + 1.0)                      # exact, only a (tm, 1) column
        h_agg = (acc_ref[...] * inv).astype(w_ref.dtype)      # bf16 for the MXU
        out = jnp.dot(h_agg, w_ref[...], preferred_element_type=jnp.float32)
        out = out + b_ref[...]
        if apply_relu:
            out = jnp.maximum(out, 0.0)
        o_ref[...] = out.astype(o_ref.dtype)


def _sage_conv_gcn_padded(adj_u8, h_pad, w_p, b_p, *, apply_relu, out_dtype,
                          tm, tk, hsrc_resident, vmem_limit):
    """One SAGEConv('gcn') layer on pre-padded operands.

    adj_u8 : [D_pad, S_pad] uint8 adjacency (zero-padded)
    h_pad  : [S_rows, Fi_p] bf16 features, S_rows >= max(S_pad, D_pad)
    w_p    : [Fi_p, Fo_p] bf16,  b_p : [1, Fo_p] f32
    Returns [D_pad, Fo_p] in out_dtype.
    """
    D_pad, S_pad = adj_u8.shape
    S_rows, Fi_p = h_pad.shape
    Fo_p = w_p.shape[1]
    assert D_pad % tm == 0 and S_pad % tk == 0
    assert S_rows >= S_pad and S_rows >= D_pad

    if hsrc_resident:
        # Constant block index => DMA'd once for the whole kernel; sliced per-k in-kernel.
        hsrc_spec = pl.BlockSpec((S_rows, Fi_p), lambda i, k: (0, 0))
    else:
        hsrc_spec = pl.BlockSpec((tk, Fi_p), lambda i, k: (k, 0))

    grid = (D_pad // tm, S_pad // tk)

    return pl.pallas_call(
        functools.partial(_sage_gcn_kernel, tk=tk, hsrc_resident=hsrc_resident,
                          apply_relu=apply_relu),
        out_shape=jax.ShapeDtypeStruct((D_pad, Fo_p), out_dtype),
        grid_spec=pltpu.PrefetchScalarGridSpec(
            num_scalar_prefetch=0,
            grid=grid,
            in_specs=[
                pl.BlockSpec((tm, tk), lambda i, k: (i, k)),       # A tile (uint8)
                hsrc_spec,                                         # h_src (bf16)
                pl.BlockSpec((tm, Fi_p), lambda i, k: (i, 0)),     # h_dst (same HBM array)
                pl.BlockSpec((Fi_p, Fo_p), lambda i, k: (0, 0)),   # W (resident)
                pl.BlockSpec((1, Fo_p), lambda i, k: (0, 0)),      # bias (resident)
            ],
            out_specs=pl.BlockSpec((tm, Fo_p), lambda i, k: (i, 0)),
            scratch_shapes=[pltpu.VMEM((tm, Fi_p), jnp.float32),   # accumulator
                            pltpu.VMEM((tm, 1), jnp.float32)],     # degree
        ),
        compiler_params=pltpu.CompilerParams(
            dimension_semantics=("parallel", "arbitrary"),
            vmem_limit_bytes=vmem_limit,
        ),
    )(adj_u8, h_pad, h_pad, w_p, b_p)


def graphsage_forward(mfgs, x, params, *, tm=512, tk=1024):
    """Equivalent of GraphSAGE_Model.forward(mfgs, x) with dense MFG adjacency blocks."""
    a1, a2 = mfgs
    w1, b1, w2, b2 = params

    D1, S1 = a1.shape
    D2, S2 = a2.shape              # DGL: S2 == D1 (layer-2 src nodes are layer-1 dst nodes)
    Fi, H = w1.shape
    C = w2.shape[1]

    Fi_p = _round_up(Fi, 128)      # lane-dense feature dims (unmasked stores, MXU-friendly)
    H_p = _round_up(H, 128)
    C_p = _round_up(C, 128)

    vmem_limit = _default_vmem_limit()
    budget = int(vmem_limit * 0.9)

    # ---- plan layer-2 tiling first so layer-1's padded output rows can be fed straight in.
    tm2 = min(tm, _round_up(D2, 32))            # 32-row multiple covers uint8/bf16 packing
    tk2 = min(tk, _round_up(S2, 128))
    while _vmem_bytes(tm2, tk2, 0, H_p, C_p, False, 4) > budget and tk2 > 128:
        tk2 = max(128, (tk2 // 2) // 128 * 128)
    while _vmem_bytes(tm2, tk2, 0, H_p, C_p, False, 4) > budget and tm2 > 32:
        tm2 = max(32, (tm2 // 2) // 32 * 32)
    D2_pad = _round_up(D2, tm2)
    S2_pad = _round_up(max(S2, D2_pad), tk2)

    # ---- layer-1 tiling; its padded dst rows must cover layer-2's padded src/dst rows.
    tm1 = min(tm, _round_up(D1, 32))
    tk1 = min(tk, _round_up(S1, 128))
    while _vmem_bytes(tm1, tk1, 0, Fi_p, H_p, False, 2) > budget and tk1 > 128:
        tk1 = max(128, (tk1 // 2) // 128 * 128)
    while _vmem_bytes(tm1, tk1, 0, Fi_p, H_p, False, 2) > budget and tm1 > 32:
        tm1 = max(32, (tm1 // 2) // 32 * 32)
    D1_pad = _round_up(max(D1, S2_pad), tm1)
    S1_pad = _round_up(max(S1, D1_pad), tk1)

    # Keep h_src fully VMEM-resident whenever it fits the budget.
    hsrc1_res = _vmem_bytes(tm1, tk1, S1_pad, Fi_p, H_p, True, 2) <= budget
    hsrc2_res = _vmem_bytes(tm2, tk2, D1_pad, H_p, C_p, True, 4) <= budget

    # One-pass pad+cast per array; adjacency stays uint8 in HBM (cast to bf16 in-kernel).
    a1_p = jnp.pad(a1.astype(jnp.uint8), ((0, D1_pad - D1), (0, S1_pad - S1)))
    a2_p = jnp.pad(a2.astype(jnp.uint8), ((0, D2_pad - D2), (0, S2_pad - S2)))
    x_p = jnp.pad(x.astype(jnp.bfloat16), ((0, S1_pad - S1), (0, Fi_p - Fi)))
    w1_p = jnp.pad(w1.astype(jnp.bfloat16), ((0, Fi_p - Fi), (0, H_p - H)))
    b1_p = jnp.pad(b1.reshape(1, -1).astype(jnp.float32), ((0, 0), (0, H_p - H)))
    w2_p = jnp.pad(w2.astype(jnp.bfloat16), ((0, H_p - H), (0, C_p - C)))
    b2_p = jnp.pad(b2.reshape(1, -1).astype(jnp.float32), ((0, 0), (0, C_p - C)))

    # Layer 1 (+ fused ReLU): emits the padded bf16 array layer 2 consumes directly
    # (no slice -> re-pad -> re-cast HBM passes between the layers).
    h1 = _sage_conv_gcn_padded(a1_p, x_p, w1_p, b1_p, apply_relu=True,
                               out_dtype=jnp.bfloat16, tm=tm1, tk=tk1,
                               hsrc_resident=hsrc1_res, vmem_limit=vmem_limit)
    # Layer 2.
    out = _sage_conv_gcn_padded(a2_p, h1, w2_p, b2_p, apply_relu=False,
                                out_dtype=jnp.float32, tm=tm2, tk=tk2,
                                hsrc_resident=hsrc2_res, vmem_limit=vmem_limit)
    return out[:D2, :C]


def _reference_forward(mfgs, x, params):
    """Pure-JAX f32 reference (DGL 'gcn' aggregator) for correctness checking."""
    a1, a2 = mfgs
    w1, b1, w2, b2 = params

    def layer(a, hs, hd, w, b):
        deg = jnp.sum(a, axis=-1, keepdims=True)
        h_agg = (a @ hs + hd) / (deg + 1.0)
        return h_agg @ w + b

    h = jax.nn.relu(layer(a1, x, x[: a1.shape[0]], w1, b1))
    return layer(a2, h, h[: a2.shape[0]], w2, b2)


if __name__ == "__main__":
    # Small synthetic problem consistent with the module's forward.
    in_feats, h_feats, num_classes = 16, 32, 8
    num_src1, num_dst1, num_dst2 = 16, 8, 4   # MFG block sizes (dst nodes prefix src nodes)

    key = jax.random.PRNGKey(0)
    k_x, k_a1, k_a2, k_w1, k_w2, k_b1, k_b2 = jax.random.split(key, 7)

    # Input node features.
    x = jax.random.normal(k_x, (num_src1, in_feats), dtype=jnp.float32)

    # Dense MFG adjacency blocks (random bipartite graphs), float32 {0,1}.
    a1 = (jax.random.uniform(k_a1, (num_dst1, num_src1)) < 0.4).astype(jnp.float32)
    a2 = (jax.random.uniform(k_a2, (num_dst2, num_dst1)) < 0.5).astype(jnp.float32)

    # fc_neigh weights + biases of the two SAGEConvs.
    w1 = jax.random.normal(k_w1, (in_feats, h_feats), dtype=jnp.float32) * 0.1
    b1 = jax.random.normal(k_b1, (h_feats,), dtype=jnp.float32) * 0.1
    w2 = jax.random.normal(k_w2, (h_feats, num_classes), dtype=jnp.float32) * 0.1
    b2 = jax.random.normal(k_b2, (num_classes,), dtype=jnp.float32) * 0.1
    params = (w1, b1, w2, b2)

    out = jax.jit(graphsage_forward)((a1, a2), x, params)
    out = jax.block_until_ready(out)

    ref = _reference_forward((a1, a2), x, params)
    assert out.shape == (num_dst2, num_classes)
    # bf16 features/weights/activations; exact degree + exact reciprocal.
    max_err = jnp.max(jnp.abs(out - ref))
    assert jnp.allclose(out, ref, atol=3e-2, rtol=3e-2), f"max abs err {max_err}"

    print("KERNEL_OK")
</pallas_src>

<mosaic_0001>
module attributes {stable_mosaic.version = 11 : i64} {
  func.func @_sage_gcn_kernel(%arg0: i32, %arg1: i32, %arg2: memref<32x128xi8, #tpu.memory_space<vmem>>, %arg3: memref<128x128xbf16, #tpu.memory_space<vmem>>, %arg4: memref<32x128xbf16, #tpu.memory_space<vmem>>, %arg5: memref<128x128xbf16, #tpu.memory_space<vmem>>, %arg6: memref<1x128xf32, #tpu.memory_space<vmem>>, %arg7: memref<32x128xf32, #tpu.memory_space<vmem>>, %arg8: memref<32x128xf32, #tpu.memory_space<vmem>>, %arg9: memref<32x1xf32, #tpu.memory_space<vmem>>) attributes {dimension_semantics = [#tpu.dimension_semantics<parallel>, #tpu.dimension_semantics<arbitrary>], iteration_bounds = array<i64: 1, 1>, scalar_prefetch = 0 : i64, scratch_operands = 2 : i64, tpu.core_type = #tpu.core_type<tc>, window_params = [{transform_indices = @transform_0, window_bounds = array<i64: 32, 128>}, {pipeline_mode = #tpu.pipeline_mode<synchronous>, transform_indices = @transform_1, window_bounds = array<i64: 128, 128>}, {transform_indices = @transform_2, window_bounds = array<i64: 32, 128>}, {pipeline_mode = #tpu.pipeline_mode<synchronous>, transform_indices = @transform_3, window_bounds = array<i64: 128, 128>}, {pipeline_mode = #tpu.pipeline_mode<synchronous>, transform_indices = @transform_4, window_bounds = array<i64: 1, 128>}, {transform_indices = @transform_5, window_bounds = array<i64: 32, 128>}]} {
    %c0_i32 = arith.constant 0 : i32
    %0 = arith.cmpi eq, %arg1, %c0_i32 : i32
    %1 = arith.extui %0 : i1 to i32
    %c0_i32_0 = arith.constant 0 : i32
    %2 = arith.cmpi ne, %1, %c0_i32_0 : i32
    scf.if %2 {
      %c0_14 = arith.constant 0 : index
      %c0_15 = arith.constant 0 : index
      %22 = vector.load %arg4[%c0_14, %c0_15] : memref<32x128xbf16, #tpu.memory_space<vmem>>, vector<32x128xbf16>
      %23 = arith.extf %22 : vector<32x128xbf16> to vector<32x128xf32>
      %c0_16 = arith.constant 0 : index
      %c0_17 = arith.constant 0 : index
      %24 = vector.load %arg8[%c0_16, %c0_17] : memref<32x128xf32, #tpu.memory_space<vmem>>, vector<32x128xf32>
      tpu.vector_store %arg8[%c0_16, %c0_17], %23 {strides = array<i32>} : memref<32x128xf32, #tpu.memory_space<vmem>>, vector<32x128xf32>,
      %cst_18 = arith.constant 0.000000e+00 : f32
      %25 = vector.broadcast %cst_18 : f32 to vector<32x1xf32>
      %c0_19 = arith.constant 0 : index
      %c0_20 = arith.constant 0 : index
      %26 = vector.load %arg9[%c0_19, %c0_20] : memref<32x1xf32, #tpu.memory_space<vmem>>, vector<32x1xf32>
      tpu.vector_store %arg9[%c0_19, %c0_20], %25 {strides = array<i32>} : memref<32x1xf32, #tpu.memory_space<vmem>>, vector<32x1xf32>,
    } else {
    }
    %c0 = arith.constant 0 : index
    %c0_1 = arith.constant 0 : index
    %3 = vector.load %arg2[%c0, %c0_1] : memref<32x128xi8, #tpu.memory_space<vmem>>, vector<32x128xi8>
    %4 = arith.uitofp %3 : vector<32x128xi8> to vector<32x128xf32>
    %c128_i32 = arith.constant 128 : i32
    %5 = arith.muli %arg1, %c128_i32 : i32
    %6 = tpu.assume_multiple %5, 128 : i32
    %7 = arith.index_cast %6 : i32 to index
    %c0_2 = arith.constant 0 : index
    %8 = vector.load %arg3[%7, %c0_2] : memref<128x128xbf16, #tpu.memory_space<vmem>>, vector<128x128xbf16>
    %c0_3 = arith.constant 0 : index
    %c0_4 = arith.constant 0 : index
    %9 = vector.load %arg8[%c0_3, %c0_4] : memref<32x128xf32, #tpu.memory_space<vmem>>, vector<32x128xf32>
    %10 = arith.truncf %4 : vector<32x128xf32> to vector<32x128xbf16>
    %cst = arith.constant dense<0.000000e+00> : vector<32x128xf32>
    %11 = tpu.matmul %10, %8, %cst {dimension_numbers = #tpu.dot_dimension_numbers<[1], [0], [0], [1], [0, 0, 1, 1], [], []>} : vector<32x128xbf16>, vector<128x128xbf16>, vector<32x128xf32> -> vector<32x128xf32>
    %12 = arith.addf %9, %11 : vector<32x128xf32>
    %c0_5 = arith.constant 0 : index
    %c0_6 = arith.constant 0 : index
    %13 = vector.load %arg8[%c0_5, %c0_6] : memref<32x128xf32, #tpu.memory_space<vmem>>, vector<32x128xf32>
    tpu.vector_store %arg8[%c0_5, %c0_6], %12 {strides = array<i32>} : memref<32x128xf32, #tpu.memory_space<vmem>>, vector<32x128xf32>,
    %c0_7 = arith.constant 0 : index
    %c0_8 = arith.constant 0 : index
    %14 = vector.load %arg9[%c0_7, %c0_8] : memref<32x1xf32, #tpu.memory_space<vmem>>, vector<32x1xf32>
    %cst_9 = arith.constant dense<0.000000e+00> : vector<32xf32>
    %15 = vector.multi_reduction <add>, %4, %cst_9 [1] : vector<32x128xf32> to vector<32xf32>
    %16 = vector.shape_cast %15 : vector<32xf32> to vector<32x1xf32>
    %17 = arith.addf %14, %16 : vector<32x1xf32>
    %c0_10 = arith.constant 0 : index
    %c0_11 = arith.constant 0 : index
    %18 = vector.load %arg9[%c0_10, %c0_11] : memref<32x1xf32, #tpu.memory_space<vmem>>, vector<32x1xf32>
    tpu.vector_store %arg9[%c0_10, %c0_11], %17 {strides = array<i32>} : memref<32x1xf32, #tpu.memory_space<vmem>>, vector<32x1xf32>,
    %c0_i32_12 = arith.constant 0 : i32
    %19 = arith.cmpi eq, %arg1, %c0_i32_12 : i32
    %20 = arith.extui %19 : i1 to i32
    %c0_i32_13 = arith.constant 0 : i32
    %21 = arith.cmpi ne, %20, %c0_i32_13 : i32
    scf.if %21 {
      %c0_14 = arith.constant 0 : index
      %c0_15 = arith.constant 0 : index
      %22 = vector.load %arg9[%c0_14, %c0_15] : memref<32x1xf32, #tpu.memory_space<vmem>>, vector<32x1xf32>
      %cst_16 = arith.constant 1.000000e+00 : f32
      %23 = vector.broadcast %cst_16 : f32 to vector<32x1xf32>
      %24 = arith.addf %22, %23 : vector<32x1xf32>
      %cst_17 = arith.constant 1.000000e+00 : f32
      %25 = vector.broadcast %cst_17 : f32 to vector<32x1xf32>
      %26 = arith.divf %25, %24 : vector<32x1xf32>
      %c0_18 = arith.constant 0 : index
      %c0_19 = arith.constant 0 : index
      %27 = vector.load %arg8[%c0_18, %c0_19] : memref<32x128xf32, #tpu.memory_space<vmem>>, vector<32x128xf32>
      %28 = vector.broadcast %26 : vector<32x1xf32> to vector<32x128xf32>
      %29 = arith.mulf %27, %28 : vector<32x128xf32>
      %30 = arith.truncf %29 : vector<32x128xf32> to vector<32x128xbf16>
      %c0_20 = arith.constant 0 : index
      %c0_21 = arith.constant 0 : index
      %31 = vector.load %arg5[%c0_20, %c0_21] : memref<128x128xbf16, #tpu.memory_space<vmem>>, vector<128x128xbf16>
      %cst_22 = arith.constant dense<0.000000e+00> : vector<32x128xf32>
      %32 = tpu.matmul %30, %31, %cst_22 {dimension_numbers = #tpu.dot_dimension_numbers<[1], [0], [0], [1], [0, 0, 1, 1], [], []>} : vector<32x128xbf16>, vector<128x128xbf16>, vector<32x128xf32> -> vector<32x128xf32>
      %c0_23 = arith.constant 0 : index
      %c0_24 = arith.constant 0 : index
      %33 = vector.load %arg6[%c0_23, %c0_24] : memref<1x128xf32, #tpu.memory_space<vmem>>, vector<1x128xf32>
      %34 = vector.broadcast %33 : vector<1x128xf32> to vector<32x128xf32>
      %35 = arith.addf %32, %34 : vector<32x128xf32>
      %c0_25 = arith.constant 0 : index
      %c0_26 = arith.constant 0 : index
      %36 = vector.load %arg7[%c0_25, %c0_26] : memref<32x128xf32, #tpu.memory_space<vmem>>, vector<32x128xf32>
      tpu.vector_store %arg7[%c0_25, %c0_26], %35 {strides = array<i32>} : memref<32x128xf32, #tpu.memory_space<vmem>>, vector<32x128xf32>,
    } else {
    }
    return
  }
  func.func @transform_0(%arg0: i32, %arg1: i32) -> (i32, i32) {
    %c0_i32 = arith.constant 0 : i32
    return %arg0, %arg1 : i32, i32
  }
  func.func @transform_1(%arg0: i32, %arg1: i32) -> (i32, i32) {
    %c0_i32 = arith.constant 0 : i32
    %c0_i32_0 = arith.constant 0 : i32
    %c0_i32_1 = arith.constant 0 : i32
    return %c0_i32, %c0_i32_0 : i32, i32
  }
  func.func @transform_2(%arg0: i32, %arg1: i32) -> (i32, i32) {
    %c0_i32 = arith.constant 0 : i32
    %c0_i32_0 = arith.constant 0 : i32
    return %arg0, %c0_i32 : i32, i32
  }
  func.func @transform_3(%arg0: i32, %arg1: i32) -> (i32, i32) {
    %c0_i32 = arith.constant 0 : i32
    %c0_i32_0 = arith.constant 0 : i32
    %c0_i32_1 = arith.constant 0 : i32
    return %c0_i32, %c0_i32_0 : i32, i32
  }
  func.func @transform_4(%arg0: i32, %arg1: i32) -> (i32, i32) {
    %c0_i32 = arith.constant 0 : i32
    %c0_i32_0 = arith.constant 0 : i32
    %c0_i32_1 = arith.constant 0 : i32
    return %c0_i32, %c0_i32_0 : i32, i32
  }
  func.func @transform_5(%arg0: i32, %arg1: i32) -> (i32, i32) {
    %c0_i32 = arith.constant 0 : i32
    %c0_i32_0 = arith.constant 0 : i32
    return %arg0, %c0_i32 : i32, i32
  }
}

module attributes {stable_mosaic.version = 11 : i64} {
  func.func @_sage_gcn_kernel(%arg0: i32, %arg1: i32, %arg2: memref<32x128xi8, #tpu.memory_space<vmem>>, %arg3: memref<128x128xbf16, #tpu.memory_space<vmem>>, %arg4: memref<32x128xbf16, #tpu.memory_space<vmem>>, %arg5: memref<128x128xbf16, #tpu.memory_space<vmem>>, %arg6: memref<1x128xf32, #tpu.memory_space<vmem>>, %arg7: memref<32x128xbf16, #tpu.memory_space<vmem>>, %arg8: memref<32x128xf32, #tpu.memory_space<vmem>>, %arg9: memref<32x1xf32, #tpu.memory_space<vmem>>) attributes {dimension_semantics = [#tpu.dimension_semantics<parallel>, #tpu.dimension_semantics<arbitrary>], iteration_bounds = array<i64: 4, 1>, scalar_prefetch = 0 : i64, scratch_operands = 2 : i64, tpu.core_type = #tpu.core_type<tc>, window_params = [{transform_indices = @transform_0, window_bounds = array<i64: 32, 128>}, {pipeline_mode = #tpu.pipeline_mode<synchronous>, transform_indices = @transform_1, window_bounds = array<i64: 128, 128>}, {transform_indices = @transform_2, window_bounds = array<i64: 32, 128>}, {pipeline_mode = #tpu.pipeline_mode<synchronous>, transform_indices = @transform_3, window_bounds = array<i64: 128, 128>}, {pipeline_mode = #tpu.pipeline_mode<synchronous>, transform_indices = @transform_4, window_bounds = array<i64: 1, 128>}, {transform_indices = @transform_5, window_bounds = array<i64: 32, 128>}]} {
    %c0_i32 = arith.constant 0 : i32
    %0 = arith.cmpi eq, %arg1, %c0_i32 : i32
    %1 = arith.extui %0 : i1 to i32
    %c0_i32_0 = arith.constant 0 : i32
    %2 = arith.cmpi ne, %1, %c0_i32_0 : i32
    scf.if %2 {
      %c0_14 = arith.constant 0 : index
      %c0_15 = arith.constant 0 : index
      %22 = vector.load %arg4[%c0_14, %c0_15] : memref<32x128xbf16, #tpu.memory_space<vmem>>, vector<32x128xbf16>
      %23 = arith.extf %22 : vector<32x128xbf16> to vector<32x128xf32>
      %c0_16 = arith.constant 0 : index
      %c0_17 = arith.constant 0 : index
      %24 = vector.load %arg8[%c0_16, %c0_17] : memref<32x128xf32, #tpu.memory_space<vmem>>, vector<32x128xf32>
      tpu.vector_store %arg8[%c0_16, %c0_17], %23 {strides = array<i32>} : memref<32x128xf32, #tpu.memory_space<vmem>>, vector<32x128xf32>,
      %cst_18 = arith.constant 0.000000e+00 : f32
      %25 = vector.broadcast %cst_18 : f32 to vector<32x1xf32>
      %c0_19 = arith.constant 0 : index
      %c0_20 = arith.constant 0 : index
      %26 = vector.load %arg9[%c0_19, %c0_20] : memref<32x1xf32, #tpu.memory_space<vmem>>, vector<32x1xf32>
      tpu.vector_store %arg9[%c0_19, %c0_20], %25 {strides = array<i32>} : memref<32x1xf32, #tpu.memory_space<vmem>>, vector<32x1xf32>,
    } else {
    }
    %c0 = arith.constant 0 : index
    %c0_1 = arith.constant 0 : index
    %3 = vector.load %arg2[%c0, %c0_1] : memref<32x128xi8, #tpu.memory_space<vmem>>, vector<32x128xi8>
    %4 = arith.uitofp %3 : vector<32x128xi8> to vector<32x128xf32>
    %c128_i32 = arith.constant 128 : i32
    %5 = arith.muli %arg1, %c128_i32 : i32
    %6 = tpu.assume_multiple %5, 128 : i32
    %7 = arith.index_cast %6 : i32 to index
    %c0_2 = arith.constant 0 : index
    %8 = vector.load %arg3[%7, %c0_2] : memref<128x128xbf16, #tpu.memory_space<vmem>>, vector<128x128xbf16>
    %c0_3 = arith.constant 0 : index
    %c0_4 = arith.constant 0 : index
    %9 = vector.load %arg8[%c0_3, %c0_4] : memref<32x128xf32, #tpu.memory_space<vmem>>, vector<32x128xf32>
    %10 = arith.truncf %4 : vector<32x128xf32> to vector<32x128xbf16>
    %cst = arith.constant dense<0.000000e+00> : vector<32x128xf32>
    %11 = tpu.matmul %10, %8, %cst {dimension_numbers = #tpu.dot_dimension_numbers<[1], [0], [0], [1], [0, 0, 1, 1], [], []>} : vector<32x128xbf16>, vector<128x128xbf16>, vector<32x128xf32> -> vector<32x128xf32>
    %12 = arith.addf %9, %11 : vector<32x128xf32>
    %c0_5 = arith.constant 0 : index
    %c0_6 = arith.constant 0 : index
    %13 = vector.load %arg8[%c0_5, %c0_6] : memref<32x128xf32, #tpu.memory_space<vmem>>, vector<32x128xf32>
    tpu.vector_store %arg8[%c0_5, %c0_6], %12 {strides = array<i32>} : memref<32x128xf32, #tpu.memory_space<vmem>>, vector<32x128xf32>,
    %c0_7 = arith.constant 0 : index
    %c0_8 = arith.constant 0 : index
    %14 = vector.load %arg9[%c0_7, %c0_8] : memref<32x1xf32, #tpu.memory_space<vmem>>, vector<32x1xf32>
    %cst_9 = arith.constant dense<0.000000e+00> : vector<32xf32>
    %15 = vector.multi_reduction <add>, %4, %cst_9 [1] : vector<32x128xf32> to vector<32xf32>
    %16 = vector.shape_cast %15 : vector<32xf32> to vector<32x1xf32>
    %17 = arith.addf %14, %16 : vector<32x1xf32>
    %c0_10 = arith.constant 0 : index
    %c0_11 = arith.constant 0 : index
    %18 = vector.load %arg9[%c0_10, %c0_11] : memref<32x1xf32, #tpu.memory_space<vmem>>, vector<32x1xf32>
    tpu.vector_store %arg9[%c0_10, %c0_11], %17 {strides = array<i32>} : memref<32x1xf32, #tpu.memory_space<vmem>>, vector<32x1xf32>,
    %c0_i32_12 = arith.constant 0 : i32
    %19 = arith.cmpi eq, %arg1, %c0_i32_12 : i32
    %20 = arith.extui %19 : i1 to i32
    %c0_i32_13 = arith.constant 0 : i32
    %21 = arith.cmpi ne, %20, %c0_i32_13 : i32
    scf.if %21 {
      %c0_14 = arith.constant 0 : index
      %c0_15 = arith.constant 0 : index
      %22 = vector.load %arg9[%c0_14, %c0_15] : memref<32x1xf32, #tpu.memory_space<vmem>>, vector<32x1xf32>
      %cst_16 = arith.constant 1.000000e+00 : f32
      %23 = vector.broadcast %cst_16 : f32 to vector<32x1xf32>
      %24 = arith.addf %22, %23 : vector<32x1xf32>
      %cst_17 = arith.constant 1.000000e+00 : f32
      %25 = vector.broadcast %cst_17 : f32 to vector<32x1xf32>
      %26 = arith.divf %25, %24 : vector<32x1xf32>
      %c0_18 = arith.constant 0 : index
      %c0_19 = arith.constant 0 : index
      %27 = vector.load %arg8[%c0_18, %c0_19] : memref<32x128xf32, #tpu.memory_space<vmem>>, vector<32x128xf32>
      %28 = vector.broadcast %26 : vector<32x1xf32> to vector<32x128xf32>
      %29 = arith.mulf %27, %28 : vector<32x128xf32>
      %30 = arith.truncf %29 : vector<32x128xf32> to vector<32x128xbf16>
      %c0_20 = arith.constant 0 : index
      %c0_21 = arith.constant 0 : index
      %31 = vector.load %arg5[%c0_20, %c0_21] : memref<128x128xbf16, #tpu.memory_space<vmem>>, vector<128x128xbf16>
      %cst_22 = arith.constant dense<0.000000e+00> : vector<32x128xf32>
      %32 = tpu.matmul %30, %31, %cst_22 {dimension_numbers = #tpu.dot_dimension_numbers<[1], [0], [0], [1], [0, 0, 1, 1], [], []>} : vector<32x128xbf16>, vector<128x128xbf16>, vector<32x128xf32> -> vector<32x128xf32>
      %c0_23 = arith.constant 0 : index
      %c0_24 = arith.constant 0 : index
      %33 = vector.load %arg6[%c0_23, %c0_24] : memref<1x128xf32, #tpu.memory_space<vmem>>, vector<1x128xf32>
      %34 = vector.broadcast %33 : vector<1x128xf32> to vector<32x128xf32>
      %35 = arith.addf %32, %34 : vector<32x128xf32>
      %cst_25 = arith.constant 0.000000e+00 : f32
      %36 = vector.broadcast %cst_25 : f32 to vector<32x128xf32>
      %37 = arith.maximumf %35, %36 : vector<32x128xf32>
      %38 = arith.truncf %37 : vector<32x128xf32> to vector<32x128xbf16>
      %c0_26 = arith.constant 0 : index
      %c0_27 = arith.constant 0 : index
      %39 = vector.load %arg7[%c0_26, %c0_27] : memref<32x128xbf16, #tpu.memory_space<vmem>>, vector<32x128xbf16>
      tpu.vector_store %arg7[%c0_26, %c0_27], %38 {strides = array<i32>} : memref<32x128xbf16, #tpu.memory_space<vmem>>, vector<32x128xbf16>,
    } else {
    }
    return
  }
  func.func @transform_0(%arg0: i32, %arg1: i32) -> (i32, i32) {
    %c0_i32 = arith.constant 0 : i32
    return %arg0, %arg1 : i32, i32
  }
  func.func @transform_1(%arg0: i32, %arg1: i32) -> (i32, i32) {
    %c0_i32 = arith.constant 0 : i32
    %c0_i32_0 = arith.constant 0 : i32
    %c0_i32_1 = arith.constant 0 : i32
    return %c0_i32, %c0_i32_0 : i32, i32
  }
  func.func @transform_2(%arg0: i32, %arg1: i32) -> (i32, i32) {
    %c0_i32 = arith.constant 0 : i32
    %c0_i32_0 = arith.constant 0 : i32
    return %arg0, %c0_i32 : i32, i32
  }
  func.func @transform_3(%arg0: i32, %arg1: i32) -> (i32, i32) {
    %c0_i32 = arith.constant 0 : i32
    %c0_i32_0 = arith.constant 0 : i32
    %c0_i32_1 = arith.constant 0 : i32
    return %c0_i32, %c0_i32_0 : i32, i32
  }
  func.func @transform_4(%arg0: i32, %arg1: i32) -> (i32, i32) {
    %c0_i32 = arith.constant 0 : i32
    %c0_i32_0 = arith.constant 0 : i32
    %c0_i32_1 = arith.constant 0 : i32
    return %c0_i32, %c0_i32_0 : i32, i32
  }
  func.func @transform_5(%arg0: i32, %arg1: i32) -> (i32, i32) {
    %c0_i32 = arith.constant 0 : i32
    %c0_i32_0 = arith.constant 0 : i32
    return %arg0, %c0_i32 : i32, i32
  }
}

</mosaic_0001>

<llo_original>
// kernel: graphsage_forward.2
$region0: #{graphsage_forward.2}
  #allocation0 [shape = 'u32[]', space=smem, size = 0x4, offset = 0x4, fixed_abs, tag = 'smem constant byte address 0x4 - core index']
  #allocation1 [shape = 'u32[144,128]{1,0:T(1,128)}', space=vmem, size = 0x12000, scoped, tag = 'internal scratch']
  #allocation2 [shape = 'f32[32,128]{1,0:T(8,128)}', space=vmem, size = 0x4000, scoped, tag = 'scratch operand']
  #allocation3 [shape = 'f32[32,1]{1,0:T(8,128)}', space=vmem, size = 0x4000, scoped, tag = 'scratch operand']
  %s0 = inlined_call_operand.vmem [shape: u8[128,128], index: 0, kind: input, shape index: {}]
  %s1 = inlined_call_operand.vmem [shape: bf16[128,128], index: 1, kind: input, shape index: {}, may-alias: {1,2}]
  %s2 = inlined_call_operand.vmem [shape: bf16[128,128], index: 2, kind: input, shape index: {}, may-alias: {1,2}]
  %s3 = inlined_call_operand.vmem [shape: bf16[128,128], index: 3, kind: input, shape index: {}]
  %s4 = inlined_call_operand.vmem [shape: f32[1,128], index: 4, kind: input, shape index: {}]
  %s5 = inlined_call_operand.vmem [shape: bf16[128,128], index: 5, kind: output, shape index: {}]
  %s6 = sld [smem:[#allocation0]]
  $region61: #{graphsage_forward.2} parent=0
    _
  %s8 = ssub.s32 1, %s6
  %s9 = scalar_select 0, %s8, %s6
  loop: start=0, step=1, limit=6
  $region2: #{graphsage_forward.2} parent=0 // loop_pre_header
    _
  $region3: #{graphsage_forward.2} parent=0 // loop_header
    %s11 = sphi 0, %s15
    %p12 = scmp.ge.s32.totalorder %s11, 6
    %s18 = sphi 0, %s30
    %s19 = sphi 0, %s26
    %s20 = sphi 0, %s18
    %s21 = sphi 0, %s19
    %s22 = sphi 0, %s20
    %s23 = sphi 0, %s21
    %s35 = sphi 0, %s37
    %s38 = sphi 0, %s35
    %s39 = sphi 0, %s38
    %s55 = sphi 0, %s39
    %s59 = sphi 0, %s59
    %s61 = sphi 0, %s59
    %s62 = sphi 0, %s61
    %s76 = sphi 0, %s62
    %s82 = sphi 0, %s84
    %s85 = sphi 0, %s82
    %s86 = sphi 0, %s85
    %s102 = sphi 0, %s86
    %s106 = sphi 0, %s106
    %s108 = sphi 0, %s106
    %s109 = sphi 0, %s108
    %s123 = sphi 0, %s109
    %s127 = sphi 0, %s127
    %s129 = sphi 0, %s127
    %s130 = sphi 0, %s129
    %s144 = sphi 0, %s130
    %s150 = sphi 0, %s152
    %s153 = sphi 0, %s150
    %s154 = sphi 0, %s153
    %s170 = sphi 0, %s154
  $region4: #{graphsage_forward.2} parent=0 // loop_header_branch
    %14 = sbr.rel (%p12) target = $region8
  $region5: #{graphsage_forward.2} parent=0 // loop_body
    %s16 = ssub.s32 %s11, 1
    %s17 = ssub.s32 %s11, 2
    %s24 = sadd.s32 1, %s19
    %p25 = scmp.ge.s32.totalorder %s24, 1
    %s26 = scalar_select %p25, 0, %s24
    %s27 = sadd.s32 1, %s18
    %s28 = scalar_select %p25, %s27, %s18
    %p29 = scmp.ge.s32.totalorder %s28, 4
    %s30 = scalar_select %p29, 0, %s28
    %s31 = ssub.s32 %s18, %s30
    %s32 = ssub.s32 %s19, %s26
    %s33 = sor.u32 %s31, %s32
    %p34 = scmp.eq.s32.totalorder %s33, 0
    %s36 = sadd.s32 %s35, 1
    %s37 = scalar_select %p34, %s35, %s36
    %p40 = pneg %p34
    %p41 = scmp.eq.s32.totalorder %s11, 3
    %p42 = por %p40, %p41
    %p43 = scmp.ne.s32.totalorder %s35, %s38
    %p44 = scmp.eq.s32.totalorder %s11, 0
    %p45 = por %p43, %p44
    %p46 = scmp.ne.s32.totalorder %s35, %s38
    %p47 = scmp.eq.s32.totalorder %s16, 3
    %p48 = por %p46, %p47
    %p49 = scmp.ne.s32.totalorder %s38, %s39
    %p50 = scmp.eq.s32.totalorder %s16, 0
    %p51 = por %p49, %p50
    %p52 = scmp.ne.s32.totalorder %s38, %s39
    %p53 = scmp.eq.s32.totalorder %s17, 3
    %p54 = por %p52, %p53
    %p56 = scmp.ne.s32.totalorder %s39, %s55
    %p57 = scmp.eq.s32.totalorder %s17, 0
    %p58 = por %p56, %p57
    %s60 = sadd.s32 %s59, 1
    %p63 = scmp.eq.s32.totalorder %s11, 3
    %p64 = scmp.ne.s32.totalorder %s59, %s61
    %p65 = scmp.eq.s32.totalorder %s11, 0
    %p66 = por %p64, %p65
    %p67 = scmp.ne.s32.totalorder %s59, %s61
    %p68 = scmp.eq.s32.totalorder %s16, 3
    %p69 = por %p67, %p68
    %p70 = scmp.ne.s32.totalorder %s61, %s62
    %p71 = scmp.eq.s32.totalorder %s16, 0
    %p72 = por %p70, %p71
    %p73 = scmp.ne.s32.totalorder %s61, %s62
    %p74 = scmp.eq.s32.totalorder %s17, 3
    %p75 = por %p73, %p74
    %p77 = scmp.ne.s32.totalorder %s62, %s76
    %p78 = scmp.eq.s32.totalorder %s17, 0
    %p79 = por %p77, %p78
    %s80 = ssub.s32 %s18, %s30
    %p81 = scmp.eq.s32.totalorder %s80, 0
    %s83 = sadd.s32 %s82, 1
    %s84 = scalar_select %p81, %s82, %s83
    %p87 = pneg %p81
    %p88 = scmp.eq.s32.totalorder %s11, 3
    %p89 = por %p87, %p88
    %p90 = scmp.ne.s32.totalorder %s82, %s85
    %p91 = scmp.eq.s32.totalorder %s11, 0
    %p92 = por %p90, %p91
    %p93 = scmp.ne.s32.totalorder %s82, %s85
    %p94 = scmp.eq.s32.totalorder %s16, 3
    %p95 = por %p93, %p94
    %p96 = scmp.ne.s32.totalorder %s85, %s86
    %p97 = scmp.eq.s32.totalorder %s16, 0
    %p98 = por %p96, %p97
    %p99 = scmp.ne.s32.totalorder %s85, %s86
    %p100 = scmp.eq.s32.totalorder %s17, 3
    %p101 = por %p99, %p100
    %p103 = scmp.ne.s32.totalorder %s86, %s102
    %p104 = scmp.eq.s32.totalorder %s17, 0
    %p105 = por %p103, %p104
    %s107 = sadd.s32 %s106, 1
    %p110 = scmp.eq.s32.totalorder %s11, 3
    %p111 = scmp.ne.s32.totalorder %s106, %s108
    %p112 = scmp.eq.s32.totalorder %s11, 0
    %p113 = por %p111, %p112
    %p114 = scmp.ne.s32.totalorder %s106, %s108
    %p115 = scmp.eq.s32.totalorder %s16, 3
    %p116 = por %p114, %p115
    %p117 = scmp.ne.s32.totalorder %s108, %s109
    %p118 = scmp.eq.s32.totalorder %s16, 0
    %p119 = por %p117, %p118
    %p120 = scmp.ne.s32.totalorder %s108, %s109
    %p121 = scmp.eq.s32.totalorder %s17, 3
    %p122 = por %p120, %p121
    %p124 = scmp.ne.s32.totalorder %s109, %s123
    %p125 = scmp.eq.s32.totalorder %s17, 0
    %p126 = por %p124, %p125
    %s128 = sadd.s32 %s127, 1
    %p131 = scmp.eq.s32.totalorder %s11, 3
    %p132 = scmp.ne.s32.totalorder %s127, %s129
    %p133 = scmp.eq.s32.totalorder %s11, 0
    %p134 = por %p132, %p133
    %p135 = scmp.ne.s32.totalorder %s127, %s129
    %p136 = scmp.eq.s32.totalorder %s16, 3
    %p137 = por %p135, %p136
    %p138 = scmp.ne.s32.totalorder %s129, %s130
    %p139 = scmp.eq.s32.totalorder %s16, 0
    %p140 = por %p138, %p139
    %p141 = scmp.ne.s32.totalorder %s129, %s130
    %p142 = scmp.eq.s32.totalorder %s17, 3
    %p143 = por %p141, %p142
    %p145 = scmp.ne.s32.totalorder %s130, %s144
    %p146 = scmp.eq.s32.totalorder %s17, 0
    %p147 = por %p145, %p146
    %s148 = ssub.s32 %s18, %s30
    %p149 = scmp.eq.s32.totalorder %s148, 0
    %s151 = sadd.s32 %s150, 1
    %s152 = scalar_select %p149, %s150, %s151
    %p155 = pneg %p149
    %p156 = scmp.eq.s32.totalorder %s11, 3
    %p157 = por %p155, %p156
    %p158 = scmp.ne.s32.totalorder %s150, %s153
    %p159 = scmp.eq.s32.totalorder %s11, 0
    %p160 = por %p158, %p159
    %p161 = scmp.ne.s32.totalorder %s150, %s153
    %p162 = scmp.eq.s32.totalorder %s16, 3
    %p163 = por %p161, %p162
    %p164 = scmp.ne.s32.totalorder %s153, %s154
    %p165 = scmp.eq.s32.totalorder %s16, 0
    %p166 = por %p164, %p165
    %p167 = scmp.ne.s32.totalorder %s153, %s154
    %p168 = scmp.eq.s32.totalorder %s17, 3
    %p169 = por %p167, %p168
    %p171 = scmp.ne.s32.totalorder %s154, %s170
    %p172 = scmp.eq.s32.totalorder %s17, 0
    %p173 = por %p171, %p172
    %p174 = scmp.le.s32.totalorder 1, %s11
    %p175 = scmp.lt.s32.totalorder %s11, 5
    %p176 = pnand %p174, %p175
    %p177 = pneg %p176
    // Predicated region
    $region9: #{graphsage_forward.2} parent=5 // pred_check
      _
    $region10: #{graphsage_forward.2} parent=5 // pred_check_branch
      %179 = sbr.rel (%p176) target = $region12
    $region11: #{graphsage_forward.2} parent=5 // pred_region
      %s180 = ssub.s32 %s11, 1
      // Predicated region
      $region13: #{graphsage_forward.2} parent=11 // pred_check
        %p181 = pneg %p72
      $region14: #{graphsage_forward.2} parent=11 // pred_check_branch
        %183 = sbr.rel (%p181) target = $region16
      $region15: #{graphsage_forward.2} parent=11 // pred_region
        _
      $region16: #{graphsage_forward.2} parent=11 // pred_fallthru
        _
      // Predicated region
      $region17: #{graphsage_forward.2} parent=11 // pred_check
        %p184 = pneg %p119
      $region18: #{graphsage_forward.2} parent=11 // pred_check_branch
        %186 = sbr.rel (%p184) target = $region20
      $region19: #{graphsage_forward.2} parent=11 // pred_region
        _
      $region20: #{graphsage_forward.2} parent=11 // pred_fallthru
        _
      // Predicated region
      $region21: #{graphsage_forward.2} parent=11 // pred_check
        %p187 = pneg %p140
      $region22: #{graphsage_forward.2} parent=11 // pred_check_branch
        %189 = sbr.rel (%p187) target = $region24
      $region23: #{graphsage_forward.2} parent=11 // pred_region
        _
      $region24: #{graphsage_forward.2} parent=11 // pred_fallthru
        _
    $region12: #{graphsage_forward.2} parent=5 // pred_fallthru
      _
    %p190 = scmp.lt.s32.totalorder %s11, 4
    // Predicated region
    $region25: #{graphsage_forward.2} parent=5 // pred_check
      %p191 = pneg %p190
    $region26: #{graphsage_forward.2} parent=5 // pred_check_branch
      %193 = sbr.rel (%p191) target = $region28
    $region27: #{graphsage_forward.2} parent=5 // pred_region
      // Predicated region
      $region29: #{graphsage_forward.2} parent=27 // pred_check
        %p194 = pneg %p45
      $region30: #{graphsage_forward.2} parent=27 // pred_check_branch
        %196 = sbr.rel (%p194) target = $region32
      $region31: #{graphsage_forward.2} parent=27 // pred_region
        %p197 = scmp.lt.s32.totalorder %s18, 3
        %s198 = scalar_select %p197, %s18, 3
        %p199 = scmp.lt.s32.totalorder %s19, 0
        %s200 = scalar_select %p199, %s19, 0
        %s201 = sadd.s32 %s200, %s198
        %s202 = smul.addr %s201, 8
        %s203 = scalar_lea.vmem %s0, %s202
      $region32: #{graphsage_forward.2} parent=27 // pred_fallthru
        _
      // Predicated region
      $region33: #{graphsage_forward.2} parent=27 // pred_check
        %p204 = pneg %p92
      $region34: #{graphsage_forward.2} parent=27 // pred_check_branch
        %206 = sbr.rel (%p204) target = $region36
      $region35: #{graphsage_forward.2} parent=27 // pred_region
        %s207 = smul.u32 4, %s18
        %p208 = scmp.lt.s32.totalorder %s207, 15
        %s209 = scalar_select %p208, %s207, 15
        %s210 = smul.addr %s209, 4
        %s211 = scalar_lea.vmem %s2, %s210
        %s212 = smul.u32 4, %s18
      $region36: #{graphsage_forward.2} parent=27 // pred_fallthru
        _
    $region28: #{graphsage_forward.2} parent=5 // pred_fallthru
      _
    %p213 = scmp.le.s32.totalorder 1, %s11
    %p214 = scmp.lt.s32.totalorder %s11, 5
    %p215 = pnand %p213, %p214
    %p216 = pneg %p215
    // Predicated region
    $region37: #{graphsage_forward.2} parent=5 // pred_check
      _
    $region38: #{graphsage_forward.2} parent=5 // pred_check_branch
      %218 = sbr.rel (%p215) target = $region40
    $region39: #{graphsage_forward.2} parent=5 // pred_region
      %s219 = ssub.s32 %s11, 1
      %p220 = scmp.lt.s32.totalorder %s20, 3
      %s221 = scalar_select %p220, %s20, 3
      %p222 = scmp.lt.s32.totalorder %s21, 0
      %s223 = scalar_select %p222, %s21, 0
      %s224 = sadd.s32 %s223, %s221
      %s225 = smul.addr %s224, 8
      %s226 = scalar_lea.vmem %s0, %s225
      %p227 = pneg %p51
      %p228 = pneg %p48
      %p229 = pneg %p72
      %p230 = pneg %p69
      %s231 = smul.u32 4, %s20
      %p232 = scmp.lt.s32.totalorder %s231, 15
      %s233 = scalar_select %p232, %s231, 15
      %s234 = smul.addr %s233, 4
      %s235 = scalar_lea.vmem %s2, %s234
      %p236 = pneg %p98
      %p237 = pneg %p95
      %p238 = pneg %p119
      %p239 = pneg %p116
      %p240 = pneg %p140
      %p241 = pneg %p137
      %p242 = pneg %p166
      %p243 = pneg %p163
      %s244 = smul.u32 4, %s20
      %p245 = scmp.lt.s32.totalorder %s244, 15
      %s246 = scalar_select %p245, %s244, 15
      %s247 = smul.addr %s246, 4
      %s248 = scalar_lea.vmem %s5, %s247
      %p249 = scmp.lt.s32.totalorder %s20, 3
      %s250 = scalar_select %p249, %s20, 3
      %p251 = scmp.lt.s32.totalorder %s21, 0
      %s252 = scalar_select %p251, %s21, 0
      %s253 = sadd.s32 %s252, %s250
      %s254 = smul.addr %s253, 8
      %s255 = scalar_lea.vmem %s0, %s254
      %s256 = smul.u32 4, %s20
      %p257 = scmp.lt.s32.totalorder %s256, 15
      %s258 = scalar_select %p257, %s256, 15
      %s259 = smul.addr %s258, 4
      %s260 = scalar_lea.vmem %s2, %s259
      %s261 = smul.u32 4, %s20
      %s262 = smul.u32 4, %s20
      %p263 = scmp.lt.s32.totalorder %s262, 15
      %s264 = scalar_select %p263, %s262, 15
      %s265 = smul.addr %s264, 4
      %s266 = scalar_lea.vmem %s5, %s265
      %s267 = smul.u32 4, %s20
      %p269 = scmp.eq.s32.totalorder %s21, 0
      // Predicated region
      $region41: #{graphsage_forward.2} parent=39 // pred_check
        %p270 = pneg %p269
      $region42: #{graphsage_forward.2} parent=39 // pred_check_branch
        %272 = sbr.rel (%p270) target = $region44
      $region43: #{graphsage_forward.2} parent=39 // pred_region
        %v273 = vld [vmem:[%s260] sm:$0xf]
        %v274 = vld [vmem:[%s260 + $0x4] sm:$0xf]
        %v275 = vld [vmem:[%s260 + $0x8] sm:$0xf]
        %v276 = vld [vmem:[%s260 + $0xc] sm:$0xf]
        %v277 = vunpack.c.l.bf16 %v273
        %v278 = vunpack.c.l.bf16 %v274
        %v279 = vunpack.c.l.bf16 %v275
        %v280 = vunpack.c.l.bf16 %v276
        %281 = vst [vmem:[#allocation2] sm:$0xff] %v277
        %282 = vst [vmem:[#allocation2 + $0x8] sm:$0xff] %v278
        %283 = vst [vmem:[#allocation2 + $0x10] sm:$0xff] %v279
        %284 = vst [vmem:[#allocation2 + $0x18] sm:$0xff] %v280
        %vm285 = vcmask 7168
        %286 = vst.msk [vmem:[#allocation3] sm:$0xff] %vm285, 0.0
        %287 = vst.msk [vmem:[#allocation3 + $0x8] sm:$0xff] %vm285, 0.0
        %288 = vst.msk [vmem:[#allocation3 + $0x10] sm:$0xff] %vm285, 0.0
        %289 = vst.msk [vmem:[#allocation3 + $0x18] sm:$0xff] %vm285, 0.0
      $region44: #{graphsage_forward.2} parent=39 // pred_fallthru
        _
      %v290 = vld [vmem:[%s255] sm:$0xff]
      %v291 = vunpack.c.0.s8 %v290
      %v292 = vunpack.c.1.s8 %v290
      %v293 = vunpack.c.2.s8 %v290
      %v294 = vunpack.c.3.s8 %v290
      %v295 = vand.u32 %v291, 255
      %v296 = vand.u32 %v292, 255
      %v297 = vand.u32 %v293, 255
      %v298 = vand.u32 %v294, 255
      %v299 = vcvt.s32.f32 %v295
      %v300 = vcvt.s32.f32 %v296
      %v301 = vcvt.s32.f32 %v297
      %v302 = vcvt.s32.f32 %v298
      %s303 = smul.u32 %s21, 128
      %s304 = sshra.s32 %s303, 3
      %s305 = sand.u32 %s303, 7
      %s306 = smul.addr %s304, 4
      %s307 = scalar_lea.vmem %s1, %s306
      %v308 = vld [vmem:[%s307] sm:$0xf]
      %v309 = vld [vmem:[%s307 + $0x4] sm:$0xf]
      %v310 = vld [vmem:[%s307 + $0x8] sm:$0xf]
      %v311 = vld [vmem:[%s307 + $0xc] sm:$0xf]
      %v312 = vld [vmem:[%s307 + $0x10] sm:$0xf]
      %v313 = vld [vmem:[%s307 + $0x14] sm:$0xf]
      %v314 = vld [vmem:[%s307 + $0x18] sm:$0xf]
      %v315 = vld [vmem:[%s307 + $0x1c] sm:$0xf]
      %v316 = vld [vmem:[%s307 + $0x20] sm:$0xf]
      %v317 = vld [vmem:[%s307 + $0x24] sm:$0xf]
      %v318 = vld [vmem:[%s307 + $0x28] sm:$0xf]
      %v319 = vld [vmem:[%s307 + $0x2c] sm:$0xf]
      %v320 = vld [vmem:[%s307 + $0x30] sm:$0xf]
      %v321 = vld [vmem:[%s307 + $0x34] sm:$0xf]
      %v322 = vld [vmem:[%s307 + $0x38] sm:$0xf]
      %v323 = vld [vmem:[%s307 + $0x3c] sm:$0xf]
      %v324 = vld [vmem:[#allocation2] sm:$0xff]
      %v325 = vld [vmem:[#allocation2 + $0x8] sm:$0xff]
      %v326 = vld [vmem:[#allocation2 + $0x10] sm:$0xff]
      %v327 = vld [vmem:[#allocation2 + $0x18] sm:$0xff]
      %v328 = vunpack.c.l.u8.bf16 %v290
      %v329 = vunpack.c.h.u8.bf16 %v290
      %v346 = vunpack.c.l.b16 %v308
      %v347 = vunpack.c.l.b16 %v309
      %v348 = vunpack.c.l.b16 %v310
      %v349 = vunpack.c.l.b16 %v311
      %v350 = vunpack.c.l.b16 %v312
      %v351 = vunpack.c.l.b16 %v313
      %v352 = vunpack.c.l.b16 %v314
      %v353 = vunpack.c.l.b16 %v315
      %v354 = vunpack.c.l.b16 %v316
      %v355 = vunpack.c.l.b16 %v317
      %v356 = vunpack.c.l.b16 %v318
      %v357 = vunpack.c.l.b16 %v319
      %v358 = vunpack.c.l.b16 %v320
      %v359 = vunpack.c.l.b16 %v321
      %v360 = vunpack.c.l.b16 %v322
      %v361 = vunpack.c.l.b16 %v323
      %v362 = vpack.c.b16 %v347, %v346
      %v363 = vpack.c.b16 %v349, %v348
      %v364 = vpack.c.b16 %v351, %v350
      %v365 = vpack.c.b16 %v353, %v352
      %v366 = vpack.c.b16 %v355, %v354
      %v367 = vpack.c.b16 %v357, %v356
      %v368 = vpack.c.b16 %v359, %v358
      %v369 = vpack.c.b16 %v361, %v360
      %378 = vmatprep.subr.bf16.mxu0 0
      %379 = vmatpush1.bf16.msra.mxu0 %v369
      %380 = vmatprep.subr.bf16.mxu0 0
      %381 = vmatpush1.bf16.msra.mxu0 %v368
      %382 = vmatprep.subr.bf16.mxu0 0
      %383 = vmatpush1.bf16.msra.mxu0 %v367
      %384 = vmatprep.subr.bf16.mxu0 0
      %385 = vmatpush1.bf16.msra.mxu0 %v366
      %386 = vmatprep.subr.bf16.mxu0 0
      %387 = vmatpush1.bf16.msra.mxu0 %v365
      %388 = vmatprep.subr.bf16.mxu0 0
      %389 = vmatpush1.bf16.msra.mxu0 %v364
      %390 = vmatprep.subr.bf16.mxu0 0
      %391 = vmatpush1.bf16.msra.mxu0 %v363
      %392 = vmatprep.subr.bf16.mxu0 0
      %393 = vmatpush1.bf16.msra.mxu0 %v362
      %394 = vmatprep.subr.bf16.mxu0 0
      %395 = vmatpush2.bf16.msra.mxu0 0
      %396 = vmatprep.subr.bf16.mxu0 0
      %397 = vmatpush2.bf16.msra.mxu0 0
      %398 = vmatprep.subr.bf16.mxu0 0
      %399 = vmatpush2.bf16.msra.mxu0 0
      %400 = vmatprep.subr.bf16.mxu0 0
      %401 = vmatpush2.bf16.msra.mxu0 0
      %402 = vmatprep.subr.bf16.mxu0 0
      %403 = vmatpush2.bf16.msra.mxu0 0
      %404 = vmatprep.subr.bf16.mxu0 0
      %405 = vmatpush2.bf16.msra.mxu0 0
      %406 = vmatprep.subr.bf16.mxu0 0
      %407 = vmatpush2.bf16.msra.mxu0 0
      %408 = vmatprep.subr.bf16.mxu0 0
      %409 = vmatpush2.bf16.msra.mxu0 0
      %410 = vmatprep.mubr.bf16.mxu0 0
      %411 = vmatmul.mubr.bf16.gmra.mxu0 %v328
      %v412 = vpop.f32.mrf.mxu0
      %v413 = vadd.f32 0.0, %v412
      %v414 = vpop.f32.mrf.mxu0
      %v415 = vpop.f32.mrf.mxu0
      %v416 = vadd.f32 0.0, %v415
      %v417 = vpop.f32.mrf.mxu0
      %418 = vmatprep.mubr.bf16.mxu0 0
      %419 = vmatmul.mubr.bf16.gmra.mxu0 %v329
      %v420 = vpop.f32.mrf.mxu0
      %v421 = vadd.f32 0.0, %v420
      %v422 = vpop.f32.mrf.mxu0
      %v423 = vpop.f32.mrf.mxu0
      %v424 = vadd.f32 0.0, %v423
      %v425 = vpop.f32.mrf.mxu0
      %426 = vdwg.mxu0
      %v427 = vadd.f32 %v324, %v413
      %v428 = vadd.f32 %v325, %v416
      %v429 = vadd.f32 %v326, %v421
      %v430 = vadd.f32 %v327, %v424
      %431 = vst [vmem:[#allocation2] sm:$0xff] %v427
      %432 = vst [vmem:[#allocation2 + $0x8] sm:$0xff] %v428
      %433 = vst [vmem:[#allocation2 + $0x10] sm:$0xff] %v429
      %434 = vst [vmem:[#allocation2 + $0x18] sm:$0xff] %v430
      %v435 = vld [vmem:[#allocation3] sm:$0xff]
      %v436 = vld [vmem:[#allocation3 + $0x8] sm:$0xff]
      %v437 = vld [vmem:[#allocation3 + $0x10] sm:$0xff]
      %v438 = vld [vmem:[#allocation3 + $0x18] sm:$0xff]
      %439 = vadd.xlane.f32.xlu0 %v299
      %v440 = vpop.xlane.xlu0 %439
      %441 = vadd.xlane.f32.xlu0 %v300
      %v442 = vpop.xlane.xlu0 %441
      %443 = vadd.xlane.f32.xlu0 %v301
      %v444 = vpop.xlane.xlu0 %443
      %445 = vadd.xlane.f32.xlu0 %v302
      %v446 = vpop.xlane.xlu0 %445
      %v447 = vadd.f32 %v435, %v440
      %v448 = vadd.f32 %v436, %v442
      %v449 = vadd.f32 %v437, %v444
      %v450 = vadd.f32 %v438, %v446
      %vm451 = vcmask 7168
      %452 = vst.msk [vmem:[#allocation3] sm:$0xff] %vm451, %v447
      %453 = vst.msk [vmem:[#allocation3 + $0x8] sm:$0xff] %vm451, %v448
      %454 = vst.msk [vmem:[#allocation3 + $0x10] sm:$0xff] %vm451, %v449
      %455 = vst.msk [vmem:[#allocation3 + $0x18] sm:$0xff] %vm451, %v450
      // Predicated region
      $region45: #{graphsage_forward.2} parent=39 // pred_check
        %p456 = pneg %p269
      $region46: #{graphsage_forward.2} parent=39 // pred_check_branch
        %458 = sbr.rel (%p456) target = $region48
      $region47: #{graphsage_forward.2} parent=39 // pred_region
        %v459 = vld [vmem:[#allocation3] sm:$0xff]
        %v460 = vld [vmem:[#allocation3 + $0x8] sm:$0xff]
        %v461 = vld [vmem:[#allocation3 + $0x10] sm:$0xff]
        %v462 = vld [vmem:[#allocation3 + $0x18] sm:$0xff]
        %v463 = vadd.f32 %v459, 1.0
        %v464 = vadd.f32 %v460, 1.0
        %v465 = vadd.f32 %v461, 1.0
        %v466 = vadd.f32 %v462, 1.0
        %v467 = vrcp.pop %v463
        %v468 = vmul.f32 1.0, %v467
        %v469 = vrcp.pop %v464
        %v470 = vmul.f32 1.0, %v469
        %v471 = vrcp.pop %v465
        %v472 = vmul.f32 1.0, %v471
        %v473 = vrcp.pop %v466
        %v474 = vmul.f32 1.0, %v473
        %v475 = vld [vmem:[#allocation2] sm:$0xff]
        %v476 = vld [vmem:[#allocation2 + $0x8] sm:$0xff]
        %v477 = vld [vmem:[#allocation2 + $0x10] sm:$0xff]
        %v478 = vld [vmem:[#allocation2 + $0x18] sm:$0xff]
        %480 = vset.pattern.permute.xlu0 0
        %481 = vperm.xlu0 %480, %v468
        %v482 = vpop.permute.xlu0 %481
        %485 = vset.pattern.permute.xlu0 0
        %486 = vperm.xlu0 %485, %v470
        %v487 = vpop.permute.xlu0 %486
        %490 = vset.pattern.permute.xlu0 0
        %491 = vperm.xlu0 %490, %v472
        %v492 = vpop.permute.xlu0 %491
        %495 = vset.pattern.permute.xlu0 0
        %496 = vperm.xlu0 %495, %v474
        %v497 = vpop.permute.xlu0 %496
        %v499 = vmul.f32 %v475, %v482
        %v500 = vmul.f32 %v476, %v487
        %v501 = vmul.f32 %v477, %v492
        %v502 = vmul.f32 %v478, %v497
        %v503 = vpack.c.bf16 %v500, %v499
        %v504 = vpack.c.bf16 %v502, %v501
        %v505 = vld [vmem:[%s3] sm:$0xf]
        %v506 = vld [vmem:[%s3 + $0x4] sm:$0xf]
        %v507 = vld [vmem:[%s3 + $0x8] sm:$0xf]
        %v508 = vld [vmem:[%s3 + $0xc] sm:$0xf]
        %v509 = vld [vmem:[%s3 + $0x10] sm:$0xf]
        %v510 = vld [vmem:[%s3 + $0x14] sm:$0xf]
        %v511 = vld [vmem:[%s3 + $0x18] sm:$0xf]
        %v512 = vld [vmem:[%s3 + $0x1c] sm:$0xf]
        %v513 = vld [vmem:[%s3 + $0x20] sm:$0xf]
        %v514 = vld [vmem:[%s3 + $0x24] sm:$0xf]
        %v515 = vld [vmem:[%s3 + $0x28] sm:$0xf]
        %v516 = vld [vmem:[%s3 + $0x2c] sm:$0xf]
        %v517 = vld [vmem:[%s3 + $0x30] sm:$0xf]
        %v518 = vld [vmem:[%s3 + $0x34] sm:$0xf]
        %v519 = vld [vmem:[%s3 + $0x38] sm:$0xf]
        %v520 = vld [vmem:[%s3 + $0x3c] sm:$0xf]
        %v521 = vld [vmem:[%s4] sm:$0x1]
        %v523 = vlaneseq
        %v524 = vshrl.u32 %v523, 7
        %v525 = vsub.s32 0, %v524
        %v526 = vrot.slane %v521, %v525
        %v544 = vunpack.c.l.b16 %v505
        %v545 = vunpack.c.l.b16 %v506
        %v546 = vunpack.c.l.b16 %v507
        %v547 = vunpack.c.l.b16 %v508
        %v548 = vunpack.c.l.b16 %v509
        %v549 = vunpack.c.l.b16 %v510
        %v550 = vunpack.c.l.b16 %v511
        %v551 = vunpack.c.l.b16 %v512
        %v552 = vunpack.c.l.b16 %v513
        %v553 = vunpack.c.l.b16 %v514
        %v554 = vunpack.c.l.b16 %v515
        %v555 = vunpack.c.l.b16 %v516
        %v556 = vunpack.c.l.b16 %v517
        %v557 = vunpack.c.l.b16 %v518
        %v558 = vunpack.c.l.b16 %v519
        %v559 = vunpack.c.l.b16 %v520
        %v560 = vpack.c.b16 %v545, %v544
        %v561 = vpack.c.b16 %v547, %v546
        %v562 = vpack.c.b16 %v549, %v548
        %v563 = vpack.c.b16 %v551, %v550
        %v564 = vpack.c.b16 %v553, %v552
        %v565 = vpack.c.b16 %v555, %v554
        %v566 = vpack.c.b16 %v557, %v556
        %v567 = vpack.c.b16 %v559, %v558
        %576 = vmatprep.subr.bf16.mxu0 0
        %577 = vmatpush1.bf16.msra.mxu0 %v567
        %578 = vmatprep.subr.bf16.mxu0 0
        %579 = vmatpush1.bf16.msra.mxu0 %v566
        %580 = vmatprep.subr.bf16.mxu0 0
        %581 = vmatpush1.bf16.msra.mxu0 %v565
        %582 = vmatprep.subr.bf16.mxu0 0
        %583 = vmatpush1.bf16.msra.mxu0 %v564
        %584 = vmatprep.subr.bf16.mxu0 0
        %585 = vmatpush1.bf16.msra.mxu0 %v563
        %586 = vmatprep.subr.bf16.mxu0 0
        %587 = vmatpush1.bf16.msra.mxu0 %v562
        %588 = vmatprep.subr.bf16.mxu0 0
        %589 = vmatpush1.bf16.msra.mxu0 %v561
        %590 = vmatprep.subr.bf16.mxu0 0
        %591 = vmatpush1.bf16.msra.mxu0 %v560
        %592 = vmatprep.subr.bf16.mxu0 0
        %593 = vmatpush2.bf16.msra.mxu0 0
        %594 = vmatprep.subr.bf16.mxu0 0
        %595 = vmatpush2.bf16.msra.mxu0 0
        %596 = vmatprep.subr.bf16.mxu0 0
        %597 = vmatpush2.bf16.msra.mxu0 0
        %598 = vmatprep.subr.bf16.mxu0 0
        %599 = vmatpush2.bf16.msra.mxu0 0
        %600 = vmatprep.subr.bf16.mxu0 0
        %601 = vmatpush2.bf16.msra.mxu0 0
        %602 = vmatprep.subr.bf16.mxu0 0
        %603 = vmatpush2.bf16.msra.mxu0 0
        %604 = vmatprep.subr.bf16.mxu0 0
        %605 = vmatpush2.bf16.msra.mxu0 0
        %606 = vmatprep.subr.bf16.mxu0 0
        %607 = vmatpush2.bf16.msra.mxu0 0
        %608 = vmatprep.mubr.bf16.mxu0 0
        %609 = vmatmul.mubr.bf16.gmra.mxu0 %v503
        %v610 = vpop.f32.mrf.mxu0
        %v611 = vadd.f32 %v526, %v610
        %v612 = vpop.f32.mrf.mxu0
        %v613 = vpop.f32.mrf.mxu0
        %v614 = vadd.f32 %v526, %v613
        %v615 = vpop.f32.mrf.mxu0
        %616 = vmatprep.mubr.bf16.mxu0 0
        %617 = vmatmul.mubr.bf16.gmra.mxu0 %v504
        %v618 = vpop.f32.mrf.mxu0
        %v619 = vadd.f32 %v526, %v618
        %v620 = vpop.f32.mrf.mxu0
        %v621 = vpop.f32.mrf.mxu0
        %v622 = vadd.f32 %v526, %v621
        %v623 = vpop.f32.mrf.mxu0
        %624 = vdwg.mxu0
        %v625 = vmax.f32 %v611, 0.0
        %v626 = vmax.f32 %v614, 0.0
        %v627 = vmax.f32 %v619, 0.0
        %v628 = vmax.f32 %v622, 0.0
        %v629 = vpack.c.bf16 %v626, %v625
        %v630 = vpack.c.bf16 %v628, %v627
        %v633 = vunpack.c.l.b16 %v629
        %v634 = vunpack.c.h.b16 %v629
        %v635 = vunpack.c.l.b16 %v630
        %v636 = vunpack.c.h.b16 %v630
        %v637 = vpack.c.b16 %v633, %v633
        %v638 = vpack.c.b16 %v634, %v634
        %v639 = vpack.c.b16 %v635, %v635
        %v640 = vpack.c.b16 %v636, %v636
        %645 = vst [vmem:[%s266] sm:$0xf] %v637
        %646 = vst [vmem:[%s266 + $0x4] sm:$0xf] %v638
        %647 = vst [vmem:[%s266 + $0x8] sm:$0xf] %v639
        %648 = vst [vmem:[%s266 + $0xc] sm:$0xf] %v640
      $region48: #{graphsage_forward.2} parent=39 // pred_fallthru
        _
      %s649 = smul.u32 4, %s20
      %p650 = scmp.lt.s32.totalorder %s649, 15
      %s651 = scalar_select %p650, %s649, 15
      %s652 = smul.addr %s651, 4
      %s653 = scalar_lea.vmem %s5, %s652
      // Predicated region
      $region49: #{graphsage_forward.2} parent=39 // pred_check
        %p654 = pneg %p163
      $region50: #{graphsage_forward.2} parent=39 // pred_check_branch
        %656 = sbr.rel (%p654) target = $region52
      $region51: #{graphsage_forward.2} parent=39 // pred_region
        %s657 = smul.u32 4, %s20
      $region52: #{graphsage_forward.2} parent=39 // pred_fallthru
        _
    $region40: #{graphsage_forward.2} parent=5 // pred_fallthru
      _
    %p658 = scmp.le.s32.totalorder 2, %s11
    // Predicated region
    $region53: #{graphsage_forward.2} parent=5 // pred_check
      %p659 = pneg %p658
    $region54: #{graphsage_forward.2} parent=5 // pred_check_branch
      %661 = sbr.rel (%p659) target = $region56
    $region55: #{graphsage_forward.2} parent=5 // pred_region
      %s662 = ssub.s32 %s11, 2
      // Predicated region
      $region57: #{graphsage_forward.2} parent=55 // pred_check
        %p663 = pneg %p169
      $region58: #{graphsage_forward.2} parent=55 // pred_check_branch
        %665 = sbr.rel (%p663) target = $region60
      $region59: #{graphsage_forward.2} parent=55 // pred_region
        %s666 = smul.u32 4, %s22
        %p667 = scmp.lt.s32.totalorder %s666, 15
        %s668 = scalar_select %p667, %s666, 15
        %s669 = smul.addr %s668, 4
        %s670 = scalar_lea.vmem %s5, %s669
      $region60: #{graphsage_forward.2} parent=55 // pred_fallthru
        _
    $region56: #{graphsage_forward.2} parent=5 // pred_fallthru
      _
  $region6: #{graphsage_forward.2} parent=0 // loop_footer
    %s15 = sadd.s32 1, %s11
  $region7: #{graphsage_forward.2} parent=0 // loop_footer_branch
    %10 = sbr.rel target = $region3
  $region8: #{graphsage_forward.2} parent=0 // loop_exit
    _

// kernel: graphsage_forward.3
$region0: #{graphsage_forward.3}
  #allocation0 [shape = 'u32[]', space=smem, size = 0x4, offset = 0x4, fixed_abs, tag = 'smem constant byte address 0x4 - core index']
  #allocation1 [shape = 'u32[144,128]{1,0:T(1,128)}', space=vmem, size = 0x12000, scoped, tag = 'internal scratch']
  #allocation2 [shape = 'f32[32,128]{1,0:T(8,128)}', space=vmem, size = 0x4000, scoped, tag = 'scratch operand']
  #allocation3 [shape = 'f32[32,1]{1,0:T(8,128)}', space=vmem, size = 0x4000, scoped, tag = 'scratch operand']
  %s0 = inlined_call_operand.vmem [shape: u8[32,128], index: 0, kind: input, shape index: {}]
  %s1 = inlined_call_operand.vmem [shape: bf16[128,128], index: 1, kind: input, shape index: {}, may-alias: {1,2}]
  %s2 = inlined_call_operand.vmem [shape: bf16[128,128], index: 2, kind: input, shape index: {}, may-alias: {1,2}]
  %s3 = inlined_call_operand.vmem [shape: bf16[128,128], index: 3, kind: input, shape index: {}]
  %s4 = inlined_call_operand.vmem [shape: f32[1,128], index: 4, kind: input, shape index: {}]
  %s5 = inlined_call_operand.vmem [shape: f32[32,128], index: 5, kind: output, shape index: {}]
  %s6 = sld [smem:[#allocation0]]
  $region38: #{graphsage_forward.3} parent=0
    _
  %s8 = ssub.s32 1, %s6
  %s9 = scalar_select 0, %s8, %s6
  // Predicated region
  $region2: #{graphsage_forward.3} parent=0 // pred_check
    _
  $region3: #{graphsage_forward.3} parent=0 // pred_check_branch
    %11 = sbr.rel (0) target = $region5
  $region4: #{graphsage_forward.3} parent=0 // pred_region
    _
  $region5: #{graphsage_forward.3} parent=0 // pred_fallthru
    _
  // Predicated region
  $region6: #{graphsage_forward.3} parent=0 // pred_check
    _
  $region7: #{graphsage_forward.3} parent=0 // pred_check_branch
    %13 = sbr.rel (0) target = $region9
  $region8: #{graphsage_forward.3} parent=0 // pred_region
    _
  $region9: #{graphsage_forward.3} parent=0 // pred_fallthru
    _
  // Predicated region
  $region10: #{graphsage_forward.3} parent=0 // pred_check
    _
  $region11: #{graphsage_forward.3} parent=0 // pred_check_branch
    %15 = sbr.rel (0) target = $region13
  $region12: #{graphsage_forward.3} parent=0 // pred_region
    _
  $region13: #{graphsage_forward.3} parent=0 // pred_fallthru
    _
  // Predicated region
  $region14: #{graphsage_forward.3} parent=0 // pred_check
    _
  $region15: #{graphsage_forward.3} parent=0 // pred_check_branch
    %17 = sbr.rel (0) target = $region17
  $region16: #{graphsage_forward.3} parent=0 // pred_region
    _
  $region17: #{graphsage_forward.3} parent=0 // pred_fallthru
    _
  // Predicated region
  $region18: #{graphsage_forward.3} parent=0 // pred_check
    _
  $region19: #{graphsage_forward.3} parent=0 // pred_check_branch
    %19 = sbr.rel (0) target = $region21
  $region20: #{graphsage_forward.3} parent=0 // pred_region
    _
  $region21: #{graphsage_forward.3} parent=0 // pred_fallthru
    _
  %p21 = scmp.eq.s32.totalorder 0, 0
  // Predicated region
  $region22: #{graphsage_forward.3} parent=0 // pred_check
    %p22 = pneg %p21
  $region23: #{graphsage_forward.3} parent=0 // pred_check_branch
    %24 = sbr.rel (%p22) target = $region25
  $region24: #{graphsage_forward.3} parent=0 // pred_region
    %v25 = vld [vmem:[%s2] sm:$0xf]
    %v26 = vld [vmem:[%s2 + $0x4] sm:$0xf]
    %v27 = vld [vmem:[%s2 + $0x8] sm:$0xf]
    %v28 = vld [vmem:[%s2 + $0xc] sm:$0xf]
    %v29 = vunpack.c.l.bf16 %v25
    %v30 = vunpack.c.l.bf16 %v26
    %v31 = vunpack.c.l.bf16 %v27
    %v32 = vunpack.c.l.bf16 %v28
    %33 = vst [vmem:[#allocation2] sm:$0xff] %v29
    %34 = vst [vmem:[#allocation2 + $0x8] sm:$0xff] %v30
    %35 = vst [vmem:[#allocation2 + $0x10] sm:$0xff] %v31
    %36 = vst [vmem:[#allocation2 + $0x18] sm:$0xff] %v32
    %vm37 = vcmask 7168
    %38 = vst.msk [vmem:[#allocation3] sm:$0xff] %vm37, 0.0
    %39 = vst.msk [vmem:[#allocation3 + $0x8] sm:$0xff] %vm37, 0.0
    %40 = vst.msk [vmem:[#allocation3 + $0x10] sm:$0xff] %vm37, 0.0
    %41 = vst.msk [vmem:[#allocation3 + $0x18] sm:$0xff] %vm37, 0.0
  $region25: #{graphsage_forward.3} parent=0 // pred_fallthru
    _
  %v42 = vld [vmem:[%s0] sm:$0xff]
  %v43 = vunpack.c.0.s8 %v42
  %v44 = vunpack.c.1.s8 %v42
  %v45 = vunpack.c.2.s8 %v42
  %v46 = vunpack.c.3.s8 %v42
  %v47 = vand.u32 %v43, 255
  %v48 = vand.u32 %v44, 255
  %v49 = vand.u32 %v45, 255
  %v50 = vand.u32 %v46, 255
  %v51 = vcvt.s32.f32 %v47
  %v52 = vcvt.s32.f32 %v48
  %v53 = vcvt.s32.f32 %v49
  %v54 = vcvt.s32.f32 %v50
  %s55 = smul.u32 0, 128
  %s56 = sshra.s32 %s55, 3
  %s57 = sand.u32 %s55, 7
  %s58 = smul.addr %s56, 4
  %s59 = scalar_lea.vmem %s1, %s58
  %v60 = vld [vmem:[%s59] sm:$0xf]
  %v61 = vld [vmem:[%s59 + $0x4] sm:$0xf]
  %v62 = vld [vmem:[%s59 + $0x8] sm:$0xf]
  %v63 = vld [vmem:[%s59 + $0xc] sm:$0xf]
  %v64 = vld [vmem:[%s59 + $0x10] sm:$0xf]
  %v65 = vld [vmem:[%s59 + $0x14] sm:$0xf]
  %v66 = vld [vmem:[%s59 + $0x18] sm:$0xf]
  %v67 = vld [vmem:[%s59 + $0x1c] sm:$0xf]
  %v68 = vld [vmem:[%s59 + $0x20] sm:$0xf]
  %v69 = vld [vmem:[%s59 + $0x24] sm:$0xf]
  %v70 = vld [vmem:[%s59 + $0x28] sm:$0xf]
  %v71 = vld [vmem:[%s59 + $0x2c] sm:$0xf]
  %v72 = vld [vmem:[%s59 + $0x30] sm:$0xf]
  %v73 = vld [vmem:[%s59 + $0x34] sm:$0xf]
  %v74 = vld [vmem:[%s59 + $0x38] sm:$0xf]
  %v75 = vld [vmem:[%s59 + $0x3c] sm:$0xf]
  %v76 = vld [vmem:[#allocation2] sm:$0xff]
  %v77 = vld [vmem:[#allocation2 + $0x8] sm:$0xff]
  %v78 = vld [vmem:[#allocation2 + $0x10] sm:$0xff]
  %v79 = vld [vmem:[#allocation2 + $0x18] sm:$0xff]
  %v80 = vunpack.c.l.u8.bf16 %v42
  %v81 = vunpack.c.h.u8.bf16 %v42
  %v98 = vunpack.c.l.b16 %v60
  %v99 = vunpack.c.l.b16 %v61
  %v100 = vunpack.c.l.b16 %v62
  %v101 = vunpack.c.l.b16 %v63
  %v102 = vunpack.c.l.b16 %v64
  %v103 = vunpack.c.l.b16 %v65
  %v104 = vunpack.c.l.b16 %v66
  %v105 = vunpack.c.l.b16 %v67
  %v106 = vunpack.c.l.b16 %v68
  %v107 = vunpack.c.l.b16 %v69
  %v108 = vunpack.c.l.b16 %v70
  %v109 = vunpack.c.l.b16 %v71
  %v110 = vunpack.c.l.b16 %v72
  %v111 = vunpack.c.l.b16 %v73
  %v112 = vunpack.c.l.b16 %v74
  %v113 = vunpack.c.l.b16 %v75
  %v114 = vpack.c.b16 %v99, %v98
  %v115 = vpack.c.b16 %v101, %v100
  %v116 = vpack.c.b16 %v103, %v102
  %v117 = vpack.c.b16 %v105, %v104
  %v118 = vpack.c.b16 %v107, %v106
  %v119 = vpack.c.b16 %v109, %v108
  %v120 = vpack.c.b16 %v111, %v110
  %v121 = vpack.c.b16 %v113, %v112
  %130 = vmatprep.subr.bf16.mxu0 0
  %131 = vmatpush1.bf16.msra.mxu0 %v121
  %132 = vmatprep.subr.bf16.mxu0 0
  %133 = vmatpush1.bf16.msra.mxu0 %v120
  %134 = vmatprep.subr.bf16.mxu0 0
  %135 = vmatpush1.bf16.msra.mxu0 %v119
  %136 = vmatprep.subr.bf16.mxu0 0
  %137 = vmatpush1.bf16.msra.mxu0 %v118
  %138 = vmatprep.subr.bf16.mxu0 0
  %139 = vmatpush1.bf16.msra.mxu0 %v117
  %140 = vmatprep.subr.bf16.mxu0 0
  %141 = vmatpush1.bf16.msra.mxu0 %v116
  %142 = vmatprep.subr.bf16.mxu0 0
  %143 = vmatpush1.bf16.msra.mxu0 %v115
  %144 = vmatprep.subr.bf16.mxu0 0
  %145 = vmatpush1.bf16.msra.mxu0 %v114
  %146 = vmatprep.subr.bf16.mxu0 0
  %147 = vmatpush2.bf16.msra.mxu0 0
  %148 = vmatprep.subr.bf16.mxu0 0
  %149 = vmatpush2.bf16.msra.mxu0 0
  %150 = vmatprep.subr.bf16.mxu0 0
  %151 = vmatpush2.bf16.msra.mxu0 0
  %152 = vmatprep.subr.bf16.mxu0 0
  %153 = vmatpush2.bf16.msra.mxu0 0
  %154 = vmatprep.subr.bf16.mxu0 0
  %155 = vmatpush2.bf16.msra.mxu0 0
  %156 = vmatprep.subr.bf16.mxu0 0
  %157 = vmatpush2.bf16.msra.mxu0 0
  %158 = vmatprep.subr.bf16.mxu0 0
  %159 = vmatpush2.bf16.msra.mxu0 0
  %160 = vmatprep.subr.bf16.mxu0 0
  %161 = vmatpush2.bf16.msra.mxu0 0
  %162 = vmatprep.mubr.bf16.mxu0 0
  %163 = vmatmul.mubr.bf16.gmra.mxu0 %v80
  %v164 = vpop.f32.mrf.mxu0
  %v165 = vadd.f32 0.0, %v164
  %v166 = vpop.f32.mrf.mxu0
  %v167 = vpop.f32.mrf.mxu0
  %v168 = vadd.f32 0.0, %v167
  %v169 = vpop.f32.mrf.mxu0
  %170 = vmatprep.mubr.bf16.mxu0 0
  %171 = vmatmul.mubr.bf16.gmra.mxu0 %v81
  %v172 = vpop.f32.mrf.mxu0
  %v173 = vadd.f32 0.0, %v172
  %v174 = vpop.f32.mrf.mxu0
  %v175 = vpop.f32.mrf.mxu0
  %v176 = vadd.f32 0.0, %v175
  %v177 = vpop.f32.mrf.mxu0
  %178 = vdwg.mxu0
  %v179 = vadd.f32 %v76, %v165
  %v180 = vadd.f32 %v77, %v168
  %v181 = vadd.f32 %v78, %v173
  %v182 = vadd.f32 %v79, %v176
  %183 = vst [vmem:[#allocation2] sm:$0xff] %v179
  %184 = vst [vmem:[#allocation2 + $0x8] sm:$0xff] %v180
  %185 = vst [vmem:[#allocation2 + $0x10] sm:$0xff] %v181
  %186 = vst [vmem:[#allocation2 + $0x18] sm:$0xff] %v182
  %v187 = vld [vmem:[#allocation3] sm:$0xff]
  %v188 = vld [vmem:[#allocation3 + $0x8] sm:$0xff]
  %v189 = vld [vmem:[#allocation3 + $0x10] sm:$0xff]
  %v190 = vld [vmem:[#allocation3 + $0x18] sm:$0xff]
  %191 = vadd.xlane.f32.xlu0 %v51
  %v192 = vpop.xlane.xlu0 %191
  %193 = vadd.xlane.f32.xlu0 %v52
  %v194 = vpop.xlane.xlu0 %193
  %195 = vadd.xlane.f32.xlu0 %v53
  %v196 = vpop.xlane.xlu0 %195
  %197 = vadd.xlane.f32.xlu0 %v54
  %v198 = vpop.xlane.xlu0 %197
  %v199 = vadd.f32 %v187, %v192
  %v200 = vadd.f32 %v188, %v194
  %v201 = vadd.f32 %v189, %v196
  %v202 = vadd.f32 %v190, %v198
  %vm203 = vcmask 7168
  %204 = vst.msk [vmem:[#allocation3] sm:$0xff] %vm203, %v199
  %205 = vst.msk [vmem:[#allocation3 + $0x8] sm:$0xff] %vm203, %v200
  %206 = vst.msk [vmem:[#allocation3 + $0x10] sm:$0xff] %vm203, %v201
  %207 = vst.msk [vmem:[#allocation3 + $0x18] sm:$0xff] %vm203, %v202
  // Predicated region
  $region26: #{graphsage_forward.3} parent=0 // pred_check
    %p208 = pneg %p21
  $region27: #{graphsage_forward.3} parent=0 // pred_check_branch
    %210 = sbr.rel (%p208) target = $region29
  $region28: #{graphsage_forward.3} parent=0 // pred_region
    %v211 = vld [vmem:[#allocation3] sm:$0xff]
    %v212 = vld [vmem:[#allocation3 + $0x8] sm:$0xff]
    %v213 = vld [vmem:[#allocation3 + $0x10] sm:$0xff]
    %v214 = vld [vmem:[#allocation3 + $0x18] sm:$0xff]
    %v215 = vadd.f32 %v211, 1.0
    %v216 = vadd.f32 %v212, 1.0
    %v217 = vadd.f32 %v213, 1.0
    %v218 = vadd.f32 %v214, 1.0
    %v219 = vrcp.pop %v215
    %v220 = vmul.f32 1.0, %v219
    %v221 = vrcp.pop %v216
    %v222 = vmul.f32 1.0, %v221
    %v223 = vrcp.pop %v217
    %v224 = vmul.f32 1.0, %v223
    %v225 = vrcp.pop %v218
    %v226 = vmul.f32 1.0, %v225
    %v227 = vld [vmem:[#allocation2] sm:$0xff]
    %v228 = vld [vmem:[#allocation2 + $0x8] sm:$0xff]
    %v229 = vld [vmem:[#allocation2 + $0x10] sm:$0xff]
    %v230 = vld [vmem:[#allocation2 + $0x18] sm:$0xff]
    %232 = vset.pattern.permute.xlu0 0
    %233 = vperm.xlu0 %232, %v220
    %v234 = vpop.permute.xlu0 %233
    %237 = vset.pattern.permute.xlu0 0
    %238 = vperm.xlu0 %237, %v222
    %v239 = vpop.permute.xlu0 %238
    %242 = vset.pattern.permute.xlu0 0
    %243 = vperm.xlu0 %242, %v224
    %v244 = vpop.permute.xlu0 %243
    %247 = vset.pattern.permute.xlu0 0
    %248 = vperm.xlu0 %247, %v226
    %v249 = vpop.permute.xlu0 %248
    %v251 = vmul.f32 %v227, %v234
    %v252 = vmul.f32 %v228, %v239
    %v253 = vmul.f32 %v229, %v244
    %v254 = vmul.f32 %v230, %v249
    %v255 = vpack.c.bf16 %v252, %v251
    %v256 = vpack.c.bf16 %v254, %v253
    %v257 = vld [vmem:[%s3] sm:$0xf]
    %v258 = vld [vmem:[%s3 + $0x4] sm:$0xf]
    %v259 = vld [vmem:[%s3 + $0x8] sm:$0xf]
    %v260 = vld [vmem:[%s3 + $0xc] sm:$0xf]
    %v261 = vld [vmem:[%s3 + $0x10] sm:$0xf]
    %v262 = vld [vmem:[%s3 + $0x14] sm:$0xf]
    %v263 = vld [vmem:[%s3 + $0x18] sm:$0xf]
    %v264 = vld [vmem:[%s3 + $0x1c] sm:$0xf]
    %v265 = vld [vmem:[%s3 + $0x20] sm:$0xf]
    %v266 = vld [vmem:[%s3 + $0x24] sm:$0xf]
    %v267 = vld [vmem:[%s3 + $0x28] sm:$0xf]
    %v268 = vld [vmem:[%s3 + $0x2c] sm:$0xf]
    %v269 = vld [vmem:[%s3 + $0x30] sm:$0xf]
    %v270 = vld [vmem:[%s3 + $0x34] sm:$0xf]
    %v271 = vld [vmem:[%s3 + $0x38] sm:$0xf]
    %v272 = vld [vmem:[%s3 + $0x3c] sm:$0xf]
    %v273 = vld [vmem:[%s4] sm:$0x1]
    %v275 = vlaneseq
    %v276 = vshrl.u32 %v275, 7
    %v277 = vsub.s32 0, %v276
    %v278 = vrot.slane %v273, %v277
    %v296 = vunpack.c.l.b16 %v257
    %v297 = vunpack.c.l.b16 %v258
    %v298 = vunpack.c.l.b16 %v259
    %v299 = vunpack.c.l.b16 %v260
    %v300 = vunpack.c.l.b16 %v261
    %v301 = vunpack.c.l.b16 %v262
    %v302 = vunpack.c.l.b16 %v263
    %v303 = vunpack.c.l.b16 %v264
    %v304 = vunpack.c.l.b16 %v265
    %v305 = vunpack.c.l.b16 %v266
    %v306 = vunpack.c.l.b16 %v267
    %v307 = vunpack.c.l.b16 %v268
    %v308 = vunpack.c.l.b16 %v269
    %v309 = vunpack.c.l.b16 %v270
    %v310 = vunpack.c.l.b16 %v271
    %v311 = vunpack.c.l.b16 %v272
    %v312 = vpack.c.b16 %v297, %v296
    %v313 = vpack.c.b16 %v299, %v298
    %v314 = vpack.c.b16 %v301, %v300
    %v315 = vpack.c.b16 %v303, %v302
    %v316 = vpack.c.b16 %v305, %v304
    %v317 = vpack.c.b16 %v307, %v306
    %v318 = vpack.c.b16 %v309, %v308
    %v319 = vpack.c.b16 %v311, %v310
    %328 = vmatprep.subr.bf16.mxu0 0
    %329 = vmatpush1.bf16.msra.mxu0 %v319
    %330 = vmatprep.subr.bf16.mxu0 0
    %331 = vmatpush1.bf16.msra.mxu0 %v318
    %332 = vmatprep.subr.bf16.mxu0 0
    %333 = vmatpush1.bf16.msra.mxu0 %v317
    %334 = vmatprep.subr.bf16.mxu0 0
    %335 = vmatpush1.bf16.msra.mxu0 %v316
    %336 = vmatprep.subr.bf16.mxu0 0
    %337 = vmatpush1.bf16.msra.mxu0 %v315
    %338 = vmatprep.subr.bf16.mxu0 0
    %339 = vmatpush1.bf16.msra.mxu0 %v314
    %340 = vmatprep.subr.bf16.mxu0 0
    %341 = vmatpush1.bf16.msra.mxu0 %v313
    %342 = vmatprep.subr.bf16.mxu0 0
    %343 = vmatpush1.bf16.msra.mxu0 %v312
    %344 = vmatprep.subr.bf16.mxu0 0
    %345 = vmatpush2.bf16.msra.mxu0 0
    %346 = vmatprep.subr.bf16.mxu0 0
    %347 = vmatpush2.bf16.msra.mxu0 0
    %348 = vmatprep.subr.bf16.mxu0 0
    %349 = vmatpush2.bf16.msra.mxu0 0
    %350 = vmatprep.subr.bf16.mxu0 0
    %351 = vmatpush2.bf16.msra.mxu0 0
    %352 = vmatprep.subr.bf16.mxu0 0
    %353 = vmatpush2.bf16.msra.mxu0 0
    %354 = vmatprep.subr.bf16.mxu0 0
    %355 = vmatpush2.bf16.msra.mxu0 0
    %356 = vmatprep.subr.bf16.mxu0 0
    %357 = vmatpush2.bf16.msra.mxu0 0
    %358 = vmatprep.subr.bf16.mxu0 0
    %359 = vmatpush2.bf16.msra.mxu0 0
    %360 = vmatprep.mubr.bf16.mxu0 0
    %361 = vmatmul.mubr.bf16.gmra.mxu0 %v255
    %v362 = vpop.f32.mrf.mxu0
    %v363 = vadd.f32 %v278, %v362
    %v364 = vpop.f32.mrf.mxu0
    %v365 = vpop.f32.mrf.mxu0
    %v366 = vadd.f32 %v278, %v365
    %v367 = vpop.f32.mrf.mxu0
    %368 = vmatprep.mubr.bf16.mxu0 0
    %369 = vmatmul.mubr.bf16.gmra.mxu0 %v256
    %v370 = vpop.f32.mrf.mxu0
    %v371 = vadd.f32 %v278, %v370
    %v372 = vpop.f32.mrf.mxu0
    %v373 = vpop.f32.mrf.mxu0
    %v374 = vadd.f32 %v278, %v373
    %v375 = vpop.f32.mrf.mxu0
    %376 = vdwg.mxu0
    %377 = vst [vmem:[%s5] sm:$0xff] %v363
    %378 = vst [vmem:[%s5 + $0x8] sm:$0xff] %v366
    %379 = vst [vmem:[%s5 + $0x10] sm:$0xff] %v371
    %380 = vst [vmem:[%s5 + $0x18] sm:$0xff] %v374
  $region29: #{graphsage_forward.3} parent=0 // pred_fallthru
    _
  // Predicated region
  $region30: #{graphsage_forward.3} parent=0 // pred_check
    _
  $region31: #{graphsage_forward.3} parent=0 // pred_check_branch
    %382 = sbr.rel (0) target = $region33
  $region32: #{graphsage_forward.3} parent=0 // pred_region
    _
  $region33: #{graphsage_forward.3} parent=0 // pred_fallthru
    _
  // Predicated region
  $region34: #{graphsage_forward.3} parent=0 // pred_check
    _
  $region35: #{graphsage_forward.3} parent=0 // pred_check_branch
    %384 = sbr.rel (0) target = $region37
  $region36: #{graphsage_forward.3} parent=0 // pred_region
    _
  $region37: #{graphsage_forward.3} parent=0 // pred_fallthru
    _

</llo_original>
